<compile_context>
chip_gen: v7x
topology: tpu7x:2x2x1
jax: 0.10.0
libtpu: 0.0.40
codegen_flags: <defaults>
</compile_context>

<pallas_src>
import functools

import jax
import jax.numpy as jnp
from jax import lax
from jax.experimental import pallas as pl
from jax.experimental.pallas import tpu as pltpu

LANE = 128


def _round_up(x, m):
    return (x + m - 1) // m * m


def _vmem_budget_bytes():
    """~80% of the physical per-core VMEM (v5e/v6e: 128 MiB, v7x: 64 MiB).

    Falls back to a conservative, v7x-safe 48 MiB if the query is unavailable.
    """
    try:
        cap = int(pltpu.get_tpu_info().vmem_capacity_bytes)
        if cap > 0:
            return int(cap * 0.8)
    except Exception:
        pass
    return 48 * 1024 * 1024


def _encoder_kernel(x_ref, w1_ref, b1_ref, w2_ref, b2_ref, out_ref, hpad_ref,
                    *, kernel_size, seq_len):
    """One batch tile of: relu(conv1) -> relu(conv2) -> max over sequence.

    x_ref   : (TB, S_p, CF_p)   compute dtype  (im2col'd in wrapper: the K
                                conv1 taps live side-by-side on the lane axis)
    w1_ref  : (CF_p, H_p)       compute dtype
    b1_ref  : (1, H_p)          f32
    w2_ref  : (K, H_p, H_p)     compute dtype
    b2_ref  : (1, H_p)          f32
    out_ref : (TB, H_p)         f32
    hpad_ref: (TB, S_p + 2*pad, H_p)  scratch, activation dtype (zero halo for conv2)
    """
    K = kernel_size
    pad = K // 2
    TB, S_p, CF = x_ref.shape
    H = w2_ref.shape[-1]

    # ---- conv1: ONE lane-dense MXU contraction over K*Cin ------------------
    x2d = x_ref[...].reshape(TB * S_p, CF)
    h = jnp.dot(x2d, w1_ref[...], preferred_element_type=jnp.float32)
    h3 = jnp.maximum(h + b1_ref[...], 0.0).reshape(TB, S_p, H)   # bias+ReLU in f32

    # Padded sequence rows (s >= seq_len) would hold relu(b1) != 0; zero them
    # so they act as conv2 "same" zero-padding and cannot corrupt the max.
    if S_p != seq_len:
        pos = lax.broadcasted_iota(jnp.int32, (1, S_p, 1), 1)
        valid = pos < seq_len
        h3 = jnp.where(valid, h3, 0.0)

    # Drop the (masked) activation into the middle of the halo-padded scratch.
    # Zeroing only the 2*pad halo rows each step is cheap and megacore-safe.
    if pad:
        hpad_ref[:, :pad, :] = jnp.zeros((TB, pad, H), hpad_ref.dtype)
        hpad_ref[:, pad + S_p:, :] = jnp.zeros((TB, pad, H), hpad_ref.dtype)
    h_act = h3.astype(hpad_ref.dtype)
    hpad_ref[:, pad:pad + S_p, :] = h_act

    # ---- conv2: K accumulating tap matmuls ----------------------------------
    # Center tap reuses the already-live activation (no hpad reload); only the
    # +-pad shifted taps read the zero-haloed scratch.
    acc = jnp.dot(h_act.reshape(TB * S_p, H), w2_ref[pad],
                  preferred_element_type=jnp.float32)
    for t in range(K):                                       # K is static & tiny
        if t == pad:
            continue
        seg = hpad_ref[:, t:t + S_p, :].reshape(TB * S_p, H)
        acc = acc + jnp.dot(seg, w2_ref[t], preferred_element_type=jnp.float32)
    h2 = jnp.maximum(acc + b2_ref[...], 0.0).reshape(TB, S_p, H)

    # MaxPool2d((seq_len, 1)) == max over the real sequence rows. ReLU output
    # is >= 0, so zeroing padded rows keeps the max exact.
    if S_p != seq_len:
        h2 = jnp.where(valid, h2, 0.0)
    out_ref[...] = jnp.max(h2, axis=1).astype(out_ref.dtype)


def encoder_forward(x, w1, b1, w2, b2, *, kernel_size, batch_tile=None,
                    compute_dtype=jnp.bfloat16, act_dtype=None):
    """x: (B, S, Cin); w*: PyTorch Conv1d layout (C_out, C_in, K); b*: (C_out,).

    compute_dtype: MXU input dtype (bf16 default; pass f32 for exact math).
    act_dtype:     inter-conv activation scratch dtype (default=compute_dtype;
                   pass f32 on v5e, whose VPU has no native bf16).
    """
    assert kernel_size % 2 == 1, "Encoder semantics require odd kernel_size"
    if act_dtype is None:
        act_dtype = compute_dtype
    B, S, Cin = x.shape
    H = w1.shape[0]
    K = kernel_size
    pad = K // 2

    esz = jnp.dtype(compute_dtype).itemsize
    asz = jnp.dtype(act_dtype).itemsize

    # Lane-dense channel padding; sequence padded to the sublane tile so the
    # per-tile (TB, S_p, C) <-> (TB*S_p, C) reshapes never relayout.
    sub = 8 * (4 // min(esz, asz, 4))
    S_p = _round_up(S, sub)
    CF = K * Cin
    CF_p = _round_up(CF, LANE)
    H_p = _round_up(H, LANE)

    # ---- wrapper-side im2col for conv1 --------------------------------------
    # TODO(synk): for very large Cin (K*Cin >> 128) a per-tap in-kernel fold
    # would avoid the K-fold HBM duplication this im2col introduces.
    x_c = x.astype(compute_dtype)
    x_halo = jnp.pad(x_c, ((0, 0), (pad, pad + S_p - S), (0, 0)))
    taps = [x_halo[:, t:t + S_p, :] for t in range(K)]
    x_fold = jnp.concatenate(taps, axis=-1)                   # (B, S_p, K*Cin)

    # ---- batch tile selection: fill the MXU, stay inside the VMEM budget ----
    budget = _vmem_budget_bytes()
    per_row = (
        2 * S_p * CF_p * esz                                   # x block (x2 bufs)
        + 2 * H_p * 4                                          # out block (x2 bufs)
        + (S_p + 2 * pad) * H_p * asz                          # hpad scratch
        + S_p * (CF_p * esz + 3 * H_p * 4 + 2 * H_p * asz)     # in-kernel temps
    )
    fixed = 2 * (CF_p * H_p + K * H_p * H_p) * esz + 4 * H_p * 4
    B8 = _round_up(B, 8)
    if batch_tile is None:
        avail = max(budget - fixed, 8 * per_row)
        tb_vmem = max(8, (avail // per_row) // 8 * 8)
        tb_want = _round_up(max(1, -(-2048 // S_p)), 8)        # ~2048 MXU rows/step
        tb = int(min(tb_vmem, tb_want))
    else:
        tb = _round_up(max(int(batch_tile), 1), 8)
    tb = min(tb, B8)
    # Keep >= 2 grid steps when the batch allows it (v7x megacore sharding and
    # input-DMA / compute overlap).
    if B8 >= 16 and tb * 2 > B8:
        tb = max(8, (B8 // 2) // 8 * 8)
    TB = tb
    B_p = _round_up(B, TB)

    xk = jnp.zeros((B_p, S_p, CF_p), compute_dtype).at[:B, :, :CF].set(x_fold)

    # Conv weights: PyTorch (C_out, C_in, K) -> tap-major (K, C_in, C_out).
    w1_t = jnp.transpose(w1, (2, 1, 0)).reshape(CF, H)        # (K*Cin, H)
    w1_k = jnp.zeros((CF_p, H_p), compute_dtype).at[:CF, :H].set(
        w1_t.astype(compute_dtype))
    w2_t = jnp.transpose(w2, (2, 1, 0))                        # (K, H, H)
    w2_k = jnp.zeros((K, H_p, H_p), compute_dtype).at[:, :H, :H].set(
        w2_t.astype(compute_dtype))
    b1_k = jnp.zeros((1, H_p), jnp.float32).at[0, :H].set(b1.astype(jnp.float32))
    b2_k = jnp.zeros((1, H_p), jnp.float32).at[0, :H].set(b2.astype(jnp.float32))

    kern = functools.partial(_encoder_kernel, kernel_size=K, seq_len=S)
    out = pl.pallas_call(
        kern,
        out_shape=jax.ShapeDtypeStruct((B_p, H_p), jnp.float32),
        grid_spec=pltpu.PrefetchScalarGridSpec(
            num_scalar_prefetch=0,
            grid=(B_p // TB,),
            in_specs=[
                pl.BlockSpec((TB, S_p, CF_p), lambda i: (i, 0, 0)),
                pl.BlockSpec((CF_p, H_p), lambda i: (0, 0)),
                pl.BlockSpec((1, H_p), lambda i: (0, 0)),
                pl.BlockSpec((K, H_p, H_p), lambda i: (0, 0, 0)),
                pl.BlockSpec((1, H_p), lambda i: (0, 0)),
            ],
            out_specs=pl.BlockSpec((TB, H_p), lambda i: (i, 0)),
            scratch_shapes=[
                pltpu.VMEM((TB, S_p + 2 * pad, H_p), act_dtype),
            ],
        ),
        compiler_params=pltpu.CompilerParams(
            dimension_semantics=("parallel",),
            vmem_limit_bytes=int(budget),
        ),
        cost_estimate=pl.CostEstimate(
            flops=int(2 * B_p * S_p * (CF_p + K * H_p) * H_p),
            transcendentals=0,
            bytes_accessed=int(xk.size * esz + w1_k.size * esz + w2_k.size * esz
                               + (b1_k.size + b2_k.size + B_p * H_p) * 4),
        ),
    )(xk, w1_k, b1_k, w2_k, b2_k)
    return out[:B, :H]


def _reference_forward(x, w1, b1, w2, b2, *, kernel_size):
    """Pure-JAX reference mirroring the PyTorch module (NCW convs)."""
    pad = kernel_size // 2
    dn = lax.conv_dimension_numbers(
        (x.shape[0], x.shape[2], x.shape[1]), w1.shape, ('NCW', 'OIW', 'NCW'))

    def conv(h_nsc, w, b):
        h_ncw = jnp.transpose(h_nsc, (0, 2, 1))
        y = lax.conv_general_dilated(h_ncw, w, window_strides=(1,),
                                     padding=[(pad, pad)],
                                     dimension_numbers=dn)
        y = y + b[None, :, None]
        return jnp.transpose(y, (0, 2, 1))                     # back to (B, S, C)

    h = jax.nn.relu(conv(x, w1, b1))
    h = jax.nn.relu(conv(h, w2, b2))
    return jnp.max(h, axis=1)


if __name__ == "__main__":
    batch, seq_len = 2, 8
    input_size, hidden_size, kernel_size = 16, 32, 3

    key = jax.random.PRNGKey(0)
    kx, kw1, kb1, kw2, kb2 = jax.random.split(key, 5)
    x = jax.random.normal(kx, (batch, seq_len, input_size), jnp.float32)
    # PyTorch Conv1d weight layout: (out_channels, in_channels, kernel_size)
    w1 = 0.1 * jax.random.normal(kw1, (hidden_size, input_size, kernel_size), jnp.float32)
    b1 = 0.1 * jax.random.normal(kb1, (hidden_size,), jnp.float32)
    w2 = 0.1 * jax.random.normal(kw2, (hidden_size, hidden_size, kernel_size), jnp.float32)
    b2 = 0.1 * jax.random.normal(kb2, (hidden_size,), jnp.float32)

    ref = _reference_forward(x, w1, b1, w2, b2, kernel_size=kernel_size)

    # Exact-math path (f32 MXU inputs, S_p == S) -> tight correctness check.
    out_f32 = encoder_forward(x, w1, b1, w2, b2, kernel_size=kernel_size,
                              compute_dtype=jnp.float32)
    out_f32 = jax.block_until_ready(out_f32)
    assert out_f32.shape == (batch, hidden_size)
    assert jnp.allclose(out_f32, ref, atol=1e-4, rtol=1e-4), "f32 mismatch vs reference"

    # Default fast path (bf16 MXU inputs, f32 accumulation; exercises the
    # padded-sequence mask since S_p=16 > S=8) -> loose check.
    # Note: the bf16 inter-conv activation loses precision vs the f32 PyTorch ref.
    out_bf16 = encoder_forward(x, w1, b1, w2, b2, kernel_size=kernel_size)
    out_bf16 = jax.block_until_ready(out_bf16)
    assert out_bf16.shape == (batch, hidden_size)
    assert jnp.allclose(out_bf16, ref, atol=5e-2, rtol=5e-2), "bf16 mismatch vs reference"

    print("KERNEL_OK")
</pallas_src>

<mosaic_0001>
module attributes {stable_mosaic.version = 11 : i64} {
  func.func @_encoder_kernel(%arg0: i32, %arg1: memref<8x8x128xf32, #tpu.memory_space<vmem>>, %arg2: memref<128x128xf32, #tpu.memory_space<vmem>>, %arg3: memref<1x128xf32, #tpu.memory_space<vmem>>, %arg4: memref<3x128x128xf32, #tpu.memory_space<vmem>>, %arg5: memref<1x128xf32, #tpu.memory_space<vmem>>, %arg6: memref<8x128xf32, #tpu.memory_space<vmem>>, %arg7: memref<8x10x128xf32, #tpu.memory_space<vmem>>) attributes {dimension_semantics = [#tpu.dimension_semantics<parallel>], iteration_bounds = array<i64: 1>, scalar_prefetch = 0 : i64, scratch_operands = 1 : i64, tpu.core_type = #tpu.core_type<tc>, window_params = [{transform_indices = @transform_0, window_bounds = array<i64: 8, 8, 128>}, {pipeline_mode = #tpu.pipeline_mode<synchronous>, transform_indices = @transform_1, window_bounds = array<i64: 128, 128>}, {pipeline_mode = #tpu.pipeline_mode<synchronous>, transform_indices = @transform_2, window_bounds = array<i64: 1, 128>}, {pipeline_mode = #tpu.pipeline_mode<synchronous>, transform_indices = @transform_3, window_bounds = array<i64: 3, 128, 128>}, {pipeline_mode = #tpu.pipeline_mode<synchronous>, transform_indices = @transform_4, window_bounds = array<i64: 1, 128>}, {transform_indices = @transform_5, window_bounds = array<i64: 8, 128>}]} {
    %c0 = arith.constant 0 : index
    %c0_0 = arith.constant 0 : index
    %c0_1 = arith.constant 0 : index
    %0 = vector.load %arg1[%c0, %c0_0, %c0_1] : memref<8x8x128xf32, #tpu.memory_space<vmem>>, vector<8x8x128xf32>
    %1 = vector.shape_cast %0 : vector<8x8x128xf32> to vector<64x128xf32>
    %c0_2 = arith.constant 0 : index
    %c0_3 = arith.constant 0 : index
    %2 = vector.load %arg2[%c0_2, %c0_3] : memref<128x128xf32, #tpu.memory_space<vmem>>, vector<128x128xf32>
    %cst = arith.constant dense<0.000000e+00> : vector<64x128xf32>
    %3 = tpu.matmul %1, %2, %cst {dimension_numbers = #tpu.dot_dimension_numbers<[1], [0], [0], [1], [0, 0, 1, 1], [], []>} : vector<64x128xf32>, vector<128x128xf32>, vector<64x128xf32> -> vector<64x128xf32>
    %c0_4 = arith.constant 0 : index
    %c0_5 = arith.constant 0 : index
    %4 = vector.load %arg3[%c0_4, %c0_5] : memref<1x128xf32, #tpu.memory_space<vmem>>, vector<1x128xf32>
    %5 = vector.broadcast %4 : vector<1x128xf32> to vector<64x128xf32>
    %6 = arith.addf %3, %5 : vector<64x128xf32>
    %cst_6 = arith.constant 0.000000e+00 : f32
    %7 = vector.broadcast %cst_6 : f32 to vector<64x128xf32>
    %8 = arith.maximumf %6, %7 : vector<64x128xf32>
    %9 = vector.shape_cast %8 : vector<64x128xf32> to vector<8x8x128xf32>
    %cst_7 = arith.constant 0.000000e+00 : f32
    %10 = vector.broadcast %cst_7 : f32 to vector<8x1x128xf32>
    %c0_8 = arith.constant 0 : index
    %c0_9 = arith.constant 0 : index
    %c0_10 = arith.constant 0 : index
    %11 = vector.load %arg7[%c0_8, %c0_9, %c0_10] : memref<8x10x128xf32, #tpu.memory_space<vmem>>, vector<8x1x128xf32>
    tpu.vector_store %arg7[%c0_8, %c0_9, %c0_10], %10 {strides = array<i32>} : memref<8x10x128xf32, #tpu.memory_space<vmem>>, vector<8x1x128xf32>,
    %cst_11 = arith.constant 0.000000e+00 : f32
    %12 = vector.broadcast %cst_11 : f32 to vector<8x1x128xf32>
    %c0_12 = arith.constant 0 : index
    %c9 = arith.constant 9 : index
    %c0_13 = arith.constant 0 : index
    %13 = vector.load %arg7[%c0_12, %c9, %c0_13] : memref<8x10x128xf32, #tpu.memory_space<vmem>>, vector<8x1x128xf32>
    tpu.vector_store %arg7[%c0_12, %c9, %c0_13], %12 {strides = array<i32>} : memref<8x10x128xf32, #tpu.memory_space<vmem>>, vector<8x1x128xf32>,
    %c0_14 = arith.constant 0 : index
    %c1 = arith.constant 1 : index
    %c0_15 = arith.constant 0 : index
    %14 = vector.load %arg7[%c0_14, %c1, %c0_15] : memref<8x10x128xf32, #tpu.memory_space<vmem>>, vector<8x8x128xf32>
    tpu.vector_store %arg7[%c0_14, %c1, %c0_15], %9 {strides = array<i32>} : memref<8x10x128xf32, #tpu.memory_space<vmem>>, vector<8x8x128xf32>,
    %15 = vector.shape_cast %9 : vector<8x8x128xf32> to vector<64x128xf32>
    %c1_16 = arith.constant 1 : index
    %c0_17 = arith.constant 0 : index
    %c0_18 = arith.constant 0 : index
    %16 = vector.load %arg4[%c1_16, %c0_17, %c0_18] : memref<3x128x128xf32, #tpu.memory_space<vmem>>, vector<1x128x128xf32>
    %17 = vector.shape_cast %16 : vector<1x128x128xf32> to vector<128x128xf32>
    %cst_19 = arith.constant dense<0.000000e+00> : vector<64x128xf32>
    %18 = tpu.matmul %15, %17, %cst_19 {dimension_numbers = #tpu.dot_dimension_numbers<[1], [0], [0], [1], [0, 0, 1, 1], [], []>} : vector<64x128xf32>, vector<128x128xf32>, vector<64x128xf32> -> vector<64x128xf32>
    %c0_20 = arith.constant 0 : index
    %c0_21 = arith.constant 0 : index
    %c0_22 = arith.constant 0 : index
    %19 = vector.load %arg7[%c0_20, %c0_21, %c0_22] : memref<8x10x128xf32, #tpu.memory_space<vmem>>, vector<8x8x128xf32>
    %20 = vector.shape_cast %19 : vector<8x8x128xf32> to vector<64x128xf32>
    %c0_23 = arith.constant 0 : index
    %c0_24 = arith.constant 0 : index
    %c0_25 = arith.constant 0 : index
    %21 = vector.load %arg4[%c0_23, %c0_24, %c0_25] : memref<3x128x128xf32, #tpu.memory_space<vmem>>, vector<1x128x128xf32>
    %22 = vector.shape_cast %21 : vector<1x128x128xf32> to vector<128x128xf32>
    %cst_26 = arith.constant dense<0.000000e+00> : vector<64x128xf32>
    %23 = tpu.matmul %20, %22, %cst_26 {dimension_numbers = #tpu.dot_dimension_numbers<[1], [0], [0], [1], [0, 0, 1, 1], [], []>} : vector<64x128xf32>, vector<128x128xf32>, vector<64x128xf32> -> vector<64x128xf32>
    %24 = arith.addf %18, %23 : vector<64x128xf32>
    %c0_27 = arith.constant 0 : index
    %c2 = arith.constant 2 : index
    %c0_28 = arith.constant 0 : index
    %25 = vector.load %arg7[%c0_27, %c2, %c0_28] : memref<8x10x128xf32, #tpu.memory_space<vmem>>, vector<8x8x128xf32>
    %26 = vector.shape_cast %25 : vector<8x8x128xf32> to vector<64x128xf32>
    %c2_29 = arith.constant 2 : index
    %c0_30 = arith.constant 0 : index
    %c0_31 = arith.constant 0 : index
    %27 = vector.load %arg4[%c2_29, %c0_30, %c0_31] : memref<3x128x128xf32, #tpu.memory_space<vmem>>, vector<1x128x128xf32>
    %28 = vector.shape_cast %27 : vector<1x128x128xf32> to vector<128x128xf32>
    %cst_32 = arith.constant dense<0.000000e+00> : vector<64x128xf32>
    %29 = tpu.matmul %26, %28, %cst_32 {dimension_numbers = #tpu.dot_dimension_numbers<[1], [0], [0], [1], [0, 0, 1, 1], [], []>} : vector<64x128xf32>, vector<128x128xf32>, vector<64x128xf32> -> vector<64x128xf32>
    %30 = arith.addf %24, %29 : vector<64x128xf32>
    %c0_33 = arith.constant 0 : index
    %c0_34 = arith.constant 0 : index
    %31 = vector.load %arg5[%c0_33, %c0_34] : memref<1x128xf32, #tpu.memory_space<vmem>>, vector<1x128xf32>
    %32 = vector.broadcast %31 : vector<1x128xf32> to vector<64x128xf32>
    %33 = arith.addf %30, %32 : vector<64x128xf32>
    %cst_35 = arith.constant 0.000000e+00 : f32
    %34 = vector.broadcast %cst_35 : f32 to vector<64x128xf32>
    %35 = arith.maximumf %33, %34 : vector<64x128xf32>
    %36 = vector.shape_cast %35 : vector<64x128xf32> to vector<8x8x128xf32>
    %cst_36 = arith.constant dense<0xFF800000> : vector<8x128xf32>
    %37 = vector.multi_reduction <maximumf>, %36, %cst_36 [1] : vector<8x8x128xf32> to vector<8x128xf32>
    %c0_37 = arith.constant 0 : index
    %c0_38 = arith.constant 0 : index
    %38 = vector.load %arg6[%c0_37, %c0_38] : memref<8x128xf32, #tpu.memory_space<vmem>>, vector<8x128xf32>
    tpu.vector_store %arg6[%c0_37, %c0_38], %37 {strides = array<i32>} : memref<8x128xf32, #tpu.memory_space<vmem>>, vector<8x128xf32>,
    return
  }
  func.func @transform_0(%arg0: i32) -> (i32, i32, i32) {
    %c0_i32 = arith.constant 0 : i32
    %c0_i32_0 = arith.constant 0 : i32
    %c0_i32_1 = arith.constant 0 : i32
    return %arg0, %c0_i32, %c0_i32_0 : i32, i32, i32
  }
  func.func @transform_1(%arg0: i32) -> (i32, i32) {
    %c0_i32 = arith.constant 0 : i32
    %c0_i32_0 = arith.constant 0 : i32
    %c0_i32_1 = arith.constant 0 : i32
    return %c0_i32, %c0_i32_0 : i32, i32
  }
  func.func @transform_2(%arg0: i32) -> (i32, i32) {
    %c0_i32 = arith.constant 0 : i32
    %c0_i32_0 = arith.constant 0 : i32
    %c0_i32_1 = arith.constant 0 : i32
    return %c0_i32, %c0_i32_0 : i32, i32
  }
  func.func @transform_3(%arg0: i32) -> (i32, i32, i32) {
    %c0_i32 = arith.constant 0 : i32
    %c0_i32_0 = arith.constant 0 : i32
    %c0_i32_1 = arith.constant 0 : i32
    %c0_i32_2 = arith.constant 0 : i32
    return %c0_i32, %c0_i32_0, %c0_i32_1 : i32, i32, i32
  }
  func.func @transform_4(%arg0: i32) -> (i32, i32) {
    %c0_i32 = arith.constant 0 : i32
    %c0_i32_0 = arith.constant 0 : i32
    %c0_i32_1 = arith.constant 0 : i32
    return %c0_i32, %c0_i32_0 : i32, i32
  }
  func.func @transform_5(%arg0: i32) -> (i32, i32) {
    %c0_i32 = arith.constant 0 : i32
    %c0_i32_0 = arith.constant 0 : i32
    return %arg0, %c0_i32 : i32, i32
  }
}

</mosaic_0001>

<llo_original>
// kernel: tpu_custom_call.1
$region0: #{tpu_custom_call.1}
  #allocation0 [shape = 'u32[]', space=smem, size = 0x4, offset = 0x4, fixed_abs, tag = 'smem constant byte address 0x4 - core index']
  #allocation1 [shape = 'u32[144,128]{1,0:T(1,128)}', space=vmem, size = 0x12000, scoped, tag = 'internal scratch']
  #allocation2 [shape = 'f32[8,10,128]{2,1,0:T(8,128)}', space=vmem, size = 0x10000, scoped, tag = 'scratch operand']
  %s0 = inlined_call_operand.hbm [shape: f32[8,8,128], index: 0, kind: input, shape index: {}]
  %s1 = inlined_call_operand.hbm [shape: f32[128,128], index: 1, kind: input, shape index: {}]
  %s2 = inlined_call_operand.vmem [shape: f32[1,128], index: 2, kind: input, shape index: {}]
  %s3 = inlined_call_operand.hbm [shape: f32[3,128,128], index: 3, kind: input, shape index: {}]
  %s4 = inlined_call_operand.vmem [shape: f32[1,128], index: 4, kind: input, shape index: {}]
  %s5 = inlined_call_operand.hbm [shape: f32[8,128], index: 5, kind: output, shape index: {}]
  %s6 = sld [smem:[#allocation0]]
  $region42: #{tpu_custom_call.1} parent=0
    _
  %s8 = ssub.s32 1, %s6
  %s9 = scalar_select 0, %s8, %s6
  $region1: #{tpu_custom_call.1} parent=0
    #allocation3 [shape = 'u8[32768]{0}', space=vmem, size = 0x8000, scoped, tag = 'input window, operand 0, single buffered']
    #allocation4 [shape = 's32[1]{0}', space=sflag, size = 0x4, scoped, tag = 'scoped memory for tpu_custom_call.1']
    #allocation5 [shape = 's32[1]{0}', space=sflag, size = 0x4, scoped, tag = 'scoped memory for tpu_custom_call.1']
    #allocation6 [shape = 'u8[65536]{0}', space=vmem, size = 0x10000, scoped, tag = 'input window, operand 1, single buffered']
    #allocation7 [shape = 's32[1]{0}', space=sflag, size = 0x4, scoped, tag = 'scoped memory for tpu_custom_call.1']
    #allocation8 [shape = 'u8[196608]{0}', space=vmem, size = 0x30000, scoped, tag = 'input window, operand 3, single buffered']
    #allocation9 [shape = 'u8[4096]{0}', space=vmem, size = 0x1000, scoped, tag = 'output window, operand 0, single buffered']
    %10 = vsyncpa [#allocation4], 0
    %11 = vsyncpa [#allocation7], 0
    %12 = vsyncpa [#allocation5], 0
    // Predicated region
    $region2: #{tpu_custom_call.1} parent=1 // pred_check
      _
    $region3: #{tpu_custom_call.1} parent=1 // pred_check_branch
      %14 = sbr.rel (0) target = $region5
    $region4: #{tpu_custom_call.1} parent=1 // pred_region
      %s16 = ssub.s32 1024, 1024
      %17 = vsyncadd [#allocation4], %s16
      %s18 = sshll.u32 [#allocation3], 4
      %s19 = int_to_ptr.vmem [resolvable:$true] %s18
      %24 = dma.hbm_to_vmem [thread:$0]  %s0, 1024, %s19, [#allocation4], 128, 128, 8
    $region5: #{tpu_custom_call.1} parent=1 // pred_fallthru
      _
    // Predicated region
    $region6: #{tpu_custom_call.1} parent=1 // pred_check
      _
    $region7: #{tpu_custom_call.1} parent=1 // pred_check_branch
      %26 = sbr.rel (0) target = $region9
    $region8: #{tpu_custom_call.1} parent=1 // pred_region
      %s28 = ssub.s32 2048, 2048
      %29 = vsyncadd [#allocation7], %s28
      %s30 = sshll.u32 [#allocation6], 4
      %s31 = int_to_ptr.vmem [resolvable:$true] %s30
      %36 = dma.hbm_to_vmem [thread:$0]  %s1, 2048, %s31, [#allocation7], 128, 128, 8
    $region9: #{tpu_custom_call.1} parent=1 // pred_fallthru
      _
    // Predicated region
    $region10: #{tpu_custom_call.1} parent=1 // pred_check
      _
    $region11: #{tpu_custom_call.1} parent=1 // pred_check_branch
      %38 = sbr.rel (0) target = $region13
    $region12: #{tpu_custom_call.1} parent=1 // pred_region
      _
    $region13: #{tpu_custom_call.1} parent=1 // pred_fallthru
      _
    // Predicated region
    $region14: #{tpu_custom_call.1} parent=1 // pred_check
      _
    $region15: #{tpu_custom_call.1} parent=1 // pred_check_branch
      %40 = sbr.rel (0) target = $region17
    $region16: #{tpu_custom_call.1} parent=1 // pred_region
      %s42 = ssub.s32 6144, 6144
      %43 = vsyncadd [#allocation7], %s42
      %s44 = sshll.u32 [#allocation8], 4
      %s45 = int_to_ptr.vmem [resolvable:$true] %s44
      %50 = dma.hbm_to_vmem [thread:$0]  %s3, 6144, %s45, [#allocation7], 128, 128, 8
    $region17: #{tpu_custom_call.1} parent=1 // pred_fallthru
      _
    // Predicated region
    $region18: #{tpu_custom_call.1} parent=1 // pred_check
      _
    $region19: #{tpu_custom_call.1} parent=1 // pred_check_branch
      %52 = sbr.rel (0) target = $region21
    $region20: #{tpu_custom_call.1} parent=1 // pred_region
      _
    $region21: #{tpu_custom_call.1} parent=1 // pred_fallthru
      _
    // Predicated region
    $region22: #{tpu_custom_call.1} parent=1 // pred_check
      _
    $region23: #{tpu_custom_call.1} parent=1 // pred_check_branch
      %54 = sbr.rel (0) target = $region25
    $region24: #{tpu_custom_call.1} parent=1 // pred_region
      %55 = dma.done [#allocation4], 1024
    $region25: #{tpu_custom_call.1} parent=1 // pred_fallthru
      _
    // Predicated region
    $region26: #{tpu_custom_call.1} parent=1 // pred_check
      _
    $region27: #{tpu_custom_call.1} parent=1 // pred_check_branch
      %57 = sbr.rel (0) target = $region29
    $region28: #{tpu_custom_call.1} parent=1 // pred_region
      %58 = dma.done [#allocation7], 2048
    $region29: #{tpu_custom_call.1} parent=1 // pred_fallthru
      _
    // Predicated region
    $region30: #{tpu_custom_call.1} parent=1 // pred_check
      _
    $region31: #{tpu_custom_call.1} parent=1 // pred_check_branch
      %60 = sbr.rel (0) target = $region33
    $region32: #{tpu_custom_call.1} parent=1 // pred_region
      %61 = dma.done [#allocation7], 6144
    $region33: #{tpu_custom_call.1} parent=1 // pred_fallthru
      _
    %v62 = vld [vmem:[#allocation3] sm:$0xff]
    %v63 = vld [vmem:[#allocation3 + $0x8] sm:$0xff]
    %v64 = vld [vmem:[#allocation3 + $0x10] sm:$0xff]
    %v65 = vld [vmem:[#allocation3 + $0x18] sm:$0xff]
    %v66 = vld [vmem:[#allocation3 + $0x20] sm:$0xff]
    %v67 = vld [vmem:[#allocation3 + $0x28] sm:$0xff]
    %v68 = vld [vmem:[#allocation3 + $0x30] sm:$0xff]
    %v69 = vld [vmem:[#allocation3 + $0x38] sm:$0xff]
    %v70 = vld [vmem:[#allocation6] sm:$0xff]
    %v71 = vld [vmem:[#allocation6 + $0x8] sm:$0xff]
    %v72 = vld [vmem:[#allocation6 + $0x10] sm:$0xff]
    %v73 = vld [vmem:[#allocation6 + $0x18] sm:$0xff]
    %v74 = vld [vmem:[#allocation6 + $0x20] sm:$0xff]
    %v75 = vld [vmem:[#allocation6 + $0x28] sm:$0xff]
    %v76 = vld [vmem:[#allocation6 + $0x30] sm:$0xff]
    %v77 = vld [vmem:[#allocation6 + $0x38] sm:$0xff]
    %v78 = vld [vmem:[#allocation6 + $0x40] sm:$0xff]
    %v79 = vld [vmem:[#allocation6 + $0x48] sm:$0xff]
    %v80 = vld [vmem:[#allocation6 + $0x50] sm:$0xff]
    %v81 = vld [vmem:[#allocation6 + $0x58] sm:$0xff]
    %v82 = vld [vmem:[#allocation6 + $0x60] sm:$0xff]
    %v83 = vld [vmem:[#allocation6 + $0x68] sm:$0xff]
    %v84 = vld [vmem:[#allocation6 + $0x70] sm:$0xff]
    %v85 = vld [vmem:[#allocation6 + $0x78] sm:$0xff]
    %v86 = vld [vmem:[%s2] sm:$0x1]
    %v88 = vlaneseq
    %v89 = vshrl.u32 %v88, 7
    %v90 = vsub.s32 0, %v89
    %v91 = vrot.slane %v86, %v90
    %93 = vmatprep.subr.mxu0 0.0
    %94 = vmatpush1.msra.mxu0 %v70
    %95 = vmatprep.subr.mxu0 0.0
    %96 = vmatpush1.msra.mxu0 %v71
    %97 = vmatprep.subr.mxu0 0.0
    %98 = vmatpush1.msra.mxu0 %v72
    %99 = vmatprep.subr.mxu0 0.0
    %100 = vmatpush1.msra.mxu0 %v73
    %101 = vmatprep.subr.mxu0 0.0
    %102 = vmatpush1.msra.mxu0 %v74
    %103 = vmatprep.subr.mxu0 0.0
    %104 = vmatpush1.msra.mxu0 %v75
    %105 = vmatprep.subr.mxu0 0.0
    %106 = vmatpush1.msra.mxu0 %v76
    %107 = vmatprep.subr.mxu0 0.0
    %108 = vmatpush1.msra.mxu0 %v77
    %109 = vmatprep.subr.mxu0 0.0
    %110 = vmatpush1.msra.mxu0 %v78
    %111 = vmatprep.subr.mxu0 0.0
    %112 = vmatpush1.msra.mxu0 %v79
    %113 = vmatprep.subr.mxu0 0.0
    %114 = vmatpush1.msra.mxu0 %v80
    %115 = vmatprep.subr.mxu0 0.0
    %116 = vmatpush1.msra.mxu0 %v81
    %117 = vmatprep.subr.mxu0 0.0
    %118 = vmatpush1.msra.mxu0 %v82
    %119 = vmatprep.subr.mxu0 0.0
    %120 = vmatpush1.msra.mxu0 %v83
    %121 = vmatprep.subr.mxu0 0.0
    %122 = vmatpush1.msra.mxu0 %v84
    %123 = vmatprep.subr.mxu0 0.0
    %124 = vmatpush1.msra.mxu0 %v85
    %125 = vmatprep.subr.mxu0 0.0
    %126 = vmatpush1.msra.mxu0 0.0
    %127 = vmatprep.subr.mxu0 0.0
    %128 = vmatpush1.msra.mxu0 0.0
    %129 = vmatprep.subr.mxu0 0.0
    %130 = vmatpush1.msra.mxu0 0.0
    %131 = vmatprep.subr.mxu0 0.0
    %132 = vmatpush1.msra.mxu0 0.0
    %133 = vmatprep.subr.mxu0 0.0
    %134 = vmatpush1.msra.mxu0 0.0
    %135 = vmatprep.subr.mxu0 0.0
    %136 = vmatpush1.msra.mxu0 0.0
    %137 = vmatprep.subr.mxu0 0.0
    %138 = vmatpush1.msra.mxu0 0.0
    %139 = vmatprep.subr.mxu0 0.0
    %140 = vmatpush1.msra.mxu0 0.0
    %141 = vmatprep.subr.mxu0 0.0
    %142 = vmatpush1.msra.mxu0 0.0
    %143 = vmatprep.subr.mxu0 0.0
    %144 = vmatpush1.msra.mxu0 0.0
    %145 = vmatprep.subr.mxu0 0.0
    %146 = vmatpush1.msra.mxu0 0.0
    %147 = vmatprep.subr.mxu0 0.0
    %148 = vmatpush1.msra.mxu0 0.0
    %149 = vmatprep.subr.mxu0 0.0
    %150 = vmatpush1.msra.mxu0 0.0
    %151 = vmatprep.subr.mxu0 0.0
    %152 = vmatpush1.msra.mxu0 0.0
    %153 = vmatprep.subr.mxu0 0.0
    %154 = vmatpush1.msra.mxu0 0.0
    %155 = vmatprep.subr.mxu0 0.0
    %156 = vmatpush1.msra.mxu0 0.0
    %157 = vmatprep.mubr.f32.mxu0 0.0
    %158 = vmatmul.mubr.f32.gmra.mrb[0].mxu0 %v62
    %v159 = vpop.f32.mrb[0].mxu0
    %v160 = vadd.f32 %v91, %v159
    %v161 = vpop.f32.mrb[0].mxu0
    %162 = vmatprep.mubr.f32.mxu0 0.0
    %163 = vmatmul.mubr.f32.gmra.mrb[0].mxu0 %v63
    %v164 = vpop.f32.mrb[0].mxu0
    %v165 = vadd.f32 %v91, %v164
    %v166 = vpop.f32.mrb[0].mxu0
    %167 = vmatprep.mubr.f32.mxu0 0.0
    %168 = vmatmul.mubr.f32.gmra.mrb[0].mxu0 %v64
    %v169 = vpop.f32.mrb[0].mxu0
    %v170 = vadd.f32 %v91, %v169
    %v171 = vpop.f32.mrb[0].mxu0
    %172 = vmatprep.mubr.f32.mxu0 0.0
    %173 = vmatmul.mubr.f32.gmra.mrb[0].mxu0 %v65
    %v174 = vpop.f32.mrb[0].mxu0
    %v175 = vadd.f32 %v91, %v174
    %v176 = vpop.f32.mrb[0].mxu0
    %177 = vmatprep.mubr.f32.mxu0 0.0
    %178 = vmatmul.mubr.f32.gmra.mrb[0].mxu0 %v66
    %v179 = vpop.f32.mrb[0].mxu0
    %v180 = vadd.f32 %v91, %v179
    %v181 = vpop.f32.mrb[0].mxu0
    %182 = vmatprep.mubr.f32.mxu0 0.0
    %183 = vmatmul.mubr.f32.gmra.mrb[0].mxu0 %v67
    %v184 = vpop.f32.mrb[0].mxu0
    %v185 = vadd.f32 %v91, %v184
    %v186 = vpop.f32.mrb[0].mxu0
    %187 = vmatprep.mubr.f32.mxu0 0.0
    %188 = vmatmul.mubr.f32.gmra.mrb[0].mxu0 %v68
    %v189 = vpop.f32.mrb[0].mxu0
    %v190 = vadd.f32 %v91, %v189
    %v191 = vpop.f32.mrb[0].mxu0
    %192 = vmatprep.mubr.f32.mxu0 0.0
    %193 = vmatmul.mubr.f32.gmra.mrb[0].mxu0 %v69
    %v194 = vpop.f32.mrb[0].mxu0
    %v195 = vadd.f32 %v91, %v194
    %v196 = vpop.f32.mrb[0].mxu0
    %197 = vdwg.mxu0
    %v198 = vmax.f32 %v160, 0.0
    %v199 = vmax.f32 %v165, 0.0
    %v200 = vmax.f32 %v170, 0.0
    %v201 = vmax.f32 %v175, 0.0
    %v202 = vmax.f32 %v180, 0.0
    %v203 = vmax.f32 %v185, 0.0
    %v204 = vmax.f32 %v190, 0.0
    %v205 = vmax.f32 %v195, 0.0
    %206 = vst [vmem:[#allocation2] sm:$0x1] 0.0
    %207 = vst [vmem:[#allocation2 + $0x10] sm:$0x1] 0.0
    %208 = vst [vmem:[#allocation2 + $0x20] sm:$0x1] 0.0
    %209 = vst [vmem:[#allocation2 + $0x30] sm:$0x1] 0.0
    %210 = vst [vmem:[#allocation2 + $0x40] sm:$0x1] 0.0
    %211 = vst [vmem:[#allocation2 + $0x50] sm:$0x1] 0.0
    %212 = vst [vmem:[#allocation2 + $0x60] sm:$0x1] 0.0
    %213 = vst [vmem:[#allocation2 + $0x70] sm:$0x1] 0.0
    %214 = vst [vmem:[#allocation2 + $0x9] sm:$0x1] 0.0
    %215 = vst [vmem:[#allocation2 + $0x19] sm:$0x1] 0.0
    %216 = vst [vmem:[#allocation2 + $0x29] sm:$0x1] 0.0
    %217 = vst [vmem:[#allocation2 + $0x39] sm:$0x1] 0.0
    %218 = vst [vmem:[#allocation2 + $0x49] sm:$0x1] 0.0
    %219 = vst [vmem:[#allocation2 + $0x59] sm:$0x1] 0.0
    %220 = vst [vmem:[#allocation2 + $0x69] sm:$0x1] 0.0
    %221 = vst [vmem:[#allocation2 + $0x79] sm:$0x1] 0.0
    %222 = vst [vmem:[#allocation2 + $0x1] sm:$0xff] %v198
    %223 = vst [vmem:[#allocation2 + $0x11] sm:$0xff] %v199
    %224 = vst [vmem:[#allocation2 + $0x21] sm:$0xff] %v200
    %225 = vst [vmem:[#allocation2 + $0x31] sm:$0xff] %v201
    %226 = vst [vmem:[#allocation2 + $0x41] sm:$0xff] %v202
    %227 = vst [vmem:[#allocation2 + $0x51] sm:$0xff] %v203
    %228 = vst [vmem:[#allocation2 + $0x61] sm:$0xff] %v204
    %229 = vst [vmem:[#allocation2 + $0x71] sm:$0xff] %v205
    %s230 = scalar_lea.vmem [#allocation8], 128
    %v231 = vld [vmem:[%s230] sm:$0xff]
    %v232 = vld [vmem:[%s230 + $0x8] sm:$0xff]
    %v233 = vld [vmem:[%s230 + $0x10] sm:$0xff]
    %v234 = vld [vmem:[%s230 + $0x18] sm:$0xff]
    %v235 = vld [vmem:[%s230 + $0x20] sm:$0xff]
    %v236 = vld [vmem:[%s230 + $0x28] sm:$0xff]
    %v237 = vld [vmem:[%s230 + $0x30] sm:$0xff]
    %v238 = vld [vmem:[%s230 + $0x38] sm:$0xff]
    %v239 = vld [vmem:[%s230 + $0x40] sm:$0xff]
    %v240 = vld [vmem:[%s230 + $0x48] sm:$0xff]
    %v241 = vld [vmem:[%s230 + $0x50] sm:$0xff]
    %v242 = vld [vmem:[%s230 + $0x58] sm:$0xff]
    %v243 = vld [vmem:[%s230 + $0x60] sm:$0xff]
    %v244 = vld [vmem:[%s230 + $0x68] sm:$0xff]
    %v245 = vld [vmem:[%s230 + $0x70] sm:$0xff]
    %v246 = vld [vmem:[%s230 + $0x78] sm:$0xff]
    %v247 = vld [vmem:[#allocation2] sm:$0xff]
    %v248 = vld [vmem:[#allocation2 + $0x10] sm:$0xff]
    %v249 = vld [vmem:[#allocation2 + $0x20] sm:$0xff]
    %v250 = vld [vmem:[#allocation2 + $0x30] sm:$0xff]
    %v251 = vld [vmem:[#allocation2 + $0x40] sm:$0xff]
    %v252 = vld [vmem:[#allocation2 + $0x50] sm:$0xff]
    %v253 = vld [vmem:[#allocation2 + $0x60] sm:$0xff]
    %v254 = vld [vmem:[#allocation2 + $0x70] sm:$0xff]
    %v255 = vld [vmem:[#allocation8] sm:$0xff]
    %v256 = vld [vmem:[#allocation8 + $0x8] sm:$0xff]
    %v257 = vld [vmem:[#allocation8 + $0x10] sm:$0xff]
    %v258 = vld [vmem:[#allocation8 + $0x18] sm:$0xff]
    %v259 = vld [vmem:[#allocation8 + $0x20] sm:$0xff]
    %v260 = vld [vmem:[#allocation8 + $0x28] sm:$0xff]
    %v261 = vld [vmem:[#allocation8 + $0x30] sm:$0xff]
    %v262 = vld [vmem:[#allocation8 + $0x38] sm:$0xff]
    %v263 = vld [vmem:[#allocation8 + $0x40] sm:$0xff]
    %v264 = vld [vmem:[#allocation8 + $0x48] sm:$0xff]
    %v265 = vld [vmem:[#allocation8 + $0x50] sm:$0xff]
    %v266 = vld [vmem:[#allocation8 + $0x58] sm:$0xff]
    %v267 = vld [vmem:[#allocation8 + $0x60] sm:$0xff]
    %v268 = vld [vmem:[#allocation8 + $0x68] sm:$0xff]
    %v269 = vld [vmem:[#allocation8 + $0x70] sm:$0xff]
    %v270 = vld [vmem:[#allocation8 + $0x78] sm:$0xff]
    %271 = vmatprep.subr.mxu0 0.0
    %272 = vmatpush1.msra.mxu0 %v255
    %273 = vmatprep.subr.mxu0 0.0
    %274 = vmatpush1.msra.mxu0 %v256
    %275 = vmatprep.subr.mxu0 0.0
    %276 = vmatpush1.msra.mxu0 %v257
    %277 = vmatprep.subr.mxu0 0.0
    %278 = vmatpush1.msra.mxu0 %v258
    %279 = vmatprep.subr.mxu0 0.0
    %280 = vmatpush1.msra.mxu0 %v259
    %281 = vmatprep.subr.mxu0 0.0
    %282 = vmatpush1.msra.mxu0 %v260
    %283 = vmatprep.subr.mxu0 0.0
    %284 = vmatpush1.msra.mxu0 %v261
    %285 = vmatprep.subr.mxu0 0.0
    %286 = vmatpush1.msra.mxu0 %v262
    %287 = vmatprep.subr.mxu0 0.0
    %288 = vmatpush1.msra.mxu0 %v263
    %289 = vmatprep.subr.mxu0 0.0
    %290 = vmatpush1.msra.mxu0 %v264
    %291 = vmatprep.subr.mxu0 0.0
    %292 = vmatpush1.msra.mxu0 %v265
    %293 = vmatprep.subr.mxu0 0.0
    %294 = vmatpush1.msra.mxu0 %v266
    %295 = vmatprep.subr.mxu0 0.0
    %296 = vmatpush1.msra.mxu0 %v267
    %297 = vmatprep.subr.mxu0 0.0
    %298 = vmatpush1.msra.mxu0 %v268
    %299 = vmatprep.subr.mxu0 0.0
    %300 = vmatpush1.msra.mxu0 %v269
    %301 = vmatprep.subr.mxu0 0.0
    %302 = vmatpush1.msra.mxu0 %v270
    %303 = vmatprep.subr.mxu0 0.0
    %304 = vmatpush1.msra.mxu0 0.0
    %305 = vmatprep.subr.mxu0 0.0
    %306 = vmatpush1.msra.mxu0 0.0
    %307 = vmatprep.subr.mxu0 0.0
    %308 = vmatpush1.msra.mxu0 0.0
    %309 = vmatprep.subr.mxu0 0.0
    %310 = vmatpush1.msra.mxu0 0.0
    %311 = vmatprep.subr.mxu0 0.0
    %312 = vmatpush1.msra.mxu0 0.0
    %313 = vmatprep.subr.mxu0 0.0
    %314 = vmatpush1.msra.mxu0 0.0
    %315 = vmatprep.subr.mxu0 0.0
    %316 = vmatpush1.msra.mxu0 0.0
    %317 = vmatprep.subr.mxu0 0.0
    %318 = vmatpush1.msra.mxu0 0.0
    %319 = vmatprep.subr.mxu0 0.0
    %320 = vmatpush1.msra.mxu0 0.0
    %321 = vmatprep.subr.mxu0 0.0
    %322 = vmatpush1.msra.mxu0 0.0
    %323 = vmatprep.subr.mxu0 0.0
    %324 = vmatpush1.msra.mxu0 0.0
    %325 = vmatprep.subr.mxu0 0.0
    %326 = vmatpush1.msra.mxu0 0.0
    %327 = vmatprep.subr.mxu0 0.0
    %328 = vmatpush1.msra.mxu0 0.0
    %329 = vmatprep.subr.mxu0 0.0
    %330 = vmatpush1.msra.mxu0 0.0
    %331 = vmatprep.subr.mxu0 0.0
    %332 = vmatpush1.msra.mxu0 0.0
    %333 = vmatprep.subr.mxu0 0.0
    %334 = vmatpush1.msra.mxu0 0.0
    %335 = vmatprep.mubr.f32.mxu0 0.0
    %336 = vmatmul.mubr.f32.gmra.mrb[0].mxu0 %v247
    %v337 = vpop.f32.mrb[0].mxu0
    %v338 = vadd.f32 0.0, %v337
    %v339 = vpop.f32.mrb[0].mxu0
    %340 = vmatprep.mubr.f32.mxu0 0.0
    %341 = vmatmul.mubr.f32.gmra.mrb[0].mxu0 %v248
    %v342 = vpop.f32.mrb[0].mxu0
    %v343 = vadd.f32 0.0, %v342
    %v344 = vpop.f32.mrb[0].mxu0
    %345 = vmatprep.mubr.f32.mxu0 0.0
    %346 = vmatmul.mubr.f32.gmra.mrb[0].mxu0 %v249
    %v347 = vpop.f32.mrb[0].mxu0
    %v348 = vadd.f32 0.0, %v347
    %v349 = vpop.f32.mrb[0].mxu0
    %350 = vmatprep.mubr.f32.mxu0 0.0
    %351 = vmatmul.mubr.f32.gmra.mrb[0].mxu0 %v250
    %v352 = vpop.f32.mrb[0].mxu0
    %v353 = vadd.f32 0.0, %v352
    %v354 = vpop.f32.mrb[0].mxu0
    %355 = vmatprep.mubr.f32.mxu0 0.0
    %356 = vmatmul.mubr.f32.gmra.mrb[0].mxu0 %v251
    %v357 = vpop.f32.mrb[0].mxu0
    %v358 = vadd.f32 0.0, %v357
    %v359 = vpop.f32.mrb[0].mxu0
    %360 = vmatprep.mubr.f32.mxu0 0.0
    %361 = vmatmul.mubr.f32.gmra.mrb[0].mxu0 %v252
    %v362 = vpop.f32.mrb[0].mxu0
    %v363 = vadd.f32 0.0, %v362
    %v364 = vpop.f32.mrb[0].mxu0
    %365 = vmatprep.mubr.f32.mxu0 0.0
    %366 = vmatmul.mubr.f32.gmra.mrb[0].mxu0 %v253
    %v367 = vpop.f32.mrb[0].mxu0
    %v368 = vadd.f32 0.0, %v367
    %v369 = vpop.f32.mrb[0].mxu0
    %370 = vmatprep.mubr.f32.mxu0 0.0
    %371 = vmatmul.mubr.f32.gmra.mrb[0].mxu0 %v254
    %v372 = vpop.f32.mrb[0].mxu0
    %v373 = vadd.f32 0.0, %v372
    %v374 = vpop.f32.mrb[0].mxu0
    %375 = vdwg.mxu0
    %376 = vmatprep.subr.mxu0 0.0
    %377 = vmatpush1.msra.mxu0 %v231
    %378 = vmatprep.subr.mxu0 0.0
    %379 = vmatpush1.msra.mxu0 %v232
    %380 = vmatprep.subr.mxu0 0.0
    %381 = vmatpush1.msra.mxu0 %v233
    %382 = vmatprep.subr.mxu0 0.0
    %383 = vmatpush1.msra.mxu0 %v234
    %384 = vmatprep.subr.mxu0 0.0
    %385 = vmatpush1.msra.mxu0 %v235
    %386 = vmatprep.subr.mxu0 0.0
    %387 = vmatpush1.msra.mxu0 %v236
    %388 = vmatprep.subr.mxu0 0.0
    %389 = vmatpush1.msra.mxu0 %v237
    %390 = vmatprep.subr.mxu0 0.0
    %391 = vmatpush1.msra.mxu0 %v238
    %392 = vmatprep.subr.mxu0 0.0
    %393 = vmatpush1.msra.mxu0 %v239
    %394 = vmatprep.subr.mxu0 0.0
    %395 = vmatpush1.msra.mxu0 %v240
    %396 = vmatprep.subr.mxu0 0.0
    %397 = vmatpush1.msra.mxu0 %v241
    %398 = vmatprep.subr.mxu0 0.0
    %399 = vmatpush1.msra.mxu0 %v242
    %400 = vmatprep.subr.mxu0 0.0
    %401 = vmatpush1.msra.mxu0 %v243
    %402 = vmatprep.subr.mxu0 0.0
    %403 = vmatpush1.msra.mxu0 %v244
    %404 = vmatprep.subr.mxu0 0.0
    %405 = vmatpush1.msra.mxu0 %v245
    %406 = vmatprep.subr.mxu0 0.0
    %407 = vmatpush1.msra.mxu0 %v246
    %408 = vmatprep.subr.mxu0 0.0
    %409 = vmatpush1.msra.mxu0 0.0
    %410 = vmatprep.subr.mxu0 0.0
    %411 = vmatpush1.msra.mxu0 0.0
    %412 = vmatprep.subr.mxu0 0.0
    %413 = vmatpush1.msra.mxu0 0.0
    %414 = vmatprep.subr.mxu0 0.0
    %415 = vmatpush1.msra.mxu0 0.0
    %416 = vmatprep.subr.mxu0 0.0
    %417 = vmatpush1.msra.mxu0 0.0
    %418 = vmatprep.subr.mxu0 0.0
    %419 = vmatpush1.msra.mxu0 0.0
    %420 = vmatprep.subr.mxu0 0.0
    %421 = vmatpush1.msra.mxu0 0.0
    %422 = vmatprep.subr.mxu0 0.0
    %423 = vmatpush1.msra.mxu0 0.0
    %424 = vmatprep.subr.mxu0 0.0
    %425 = vmatpush1.msra.mxu0 0.0
    %426 = vmatprep.subr.mxu0 0.0
    %427 = vmatpush1.msra.mxu0 0.0
    %428 = vmatprep.subr.mxu0 0.0
    %429 = vmatpush1.msra.mxu0 0.0
    %430 = vmatprep.subr.mxu0 0.0
    %431 = vmatpush1.msra.mxu0 0.0
    %432 = vmatprep.subr.mxu0 0.0
    %433 = vmatpush1.msra.mxu0 0.0
    %434 = vmatprep.subr.mxu0 0.0
    %435 = vmatpush1.msra.mxu0 0.0
    %436 = vmatprep.subr.mxu0 0.0
    %437 = vmatpush1.msra.mxu0 0.0
    %438 = vmatprep.subr.mxu0 0.0
    %439 = vmatpush1.msra.mxu0 0.0
    %440 = vmatprep.mubr.f32.mxu0 0.0
    %441 = vmatmul.mubr.f32.gmra.mrb[0].mxu0 %v198
    %v442 = vpop.f32.mrb[0].mxu0
    %v443 = vadd.f32 %v338, %v442
    %v444 = vpop.f32.mrb[0].mxu0
    %445 = vmatprep.mubr.f32.mxu0 0.0
    %446 = vmatmul.mubr.f32.gmra.mrb[0].mxu0 %v199
    %v447 = vpop.f32.mrb[0].mxu0
    %v448 = vadd.f32 %v343, %v447
    %v449 = vpop.f32.mrb[0].mxu0
    %450 = vmatprep.mubr.f32.mxu0 0.0
    %451 = vmatmul.mubr.f32.gmra.mrb[0].mxu0 %v200
    %v452 = vpop.f32.mrb[0].mxu0
    %v453 = vadd.f32 %v348, %v452
    %v454 = vpop.f32.mrb[0].mxu0
    %455 = vmatprep.mubr.f32.mxu0 0.0
    %456 = vmatmul.mubr.f32.gmra.mrb[0].mxu0 %v201
    %v457 = vpop.f32.mrb[0].mxu0
    %v458 = vadd.f32 %v353, %v457
    %v459 = vpop.f32.mrb[0].mxu0
    %460 = vmatprep.mubr.f32.mxu0 0.0
    %461 = vmatmul.mubr.f32.gmra.mrb[0].mxu0 %v202
    %v462 = vpop.f32.mrb[0].mxu0
    %v463 = vadd.f32 %v358, %v462
    %v464 = vpop.f32.mrb[0].mxu0
    %465 = vmatprep.mubr.f32.mxu0 0.0
    %466 = vmatmul.mubr.f32.gmra.mrb[0].mxu0 %v203
    %v467 = vpop.f32.mrb[0].mxu0
    %v468 = vadd.f32 %v363, %v467
    %v469 = vpop.f32.mrb[0].mxu0
    %470 = vmatprep.mubr.f32.mxu0 0.0
    %471 = vmatmul.mubr.f32.gmra.mrb[0].mxu0 %v204
    %v472 = vpop.f32.mrb[0].mxu0
    %v473 = vadd.f32 %v368, %v472
    %v474 = vpop.f32.mrb[0].mxu0
    %475 = vmatprep.mubr.f32.mxu0 0.0
    %476 = vmatmul.mubr.f32.gmra.mrb[0].mxu0 %v205
    %v477 = vpop.f32.mrb[0].mxu0
    %v478 = vadd.f32 %v373, %v477
    %v479 = vpop.f32.mrb[0].mxu0
    %480 = vdwg.mxu0
    %v481 = vld [vmem:[#allocation2 + $0x2] sm:$0xff]
    %v482 = vld [vmem:[#allocation2 + $0x12] sm:$0xff]
    %v483 = vld [vmem:[#allocation2 + $0x22] sm:$0xff]
    %v484 = vld [vmem:[#allocation2 + $0x32] sm:$0xff]
    %v485 = vld [vmem:[#allocation2 + $0x42] sm:$0xff]
    %v486 = vld [vmem:[#allocation2 + $0x52] sm:$0xff]
    %v487 = vld [vmem:[#allocation2 + $0x62] sm:$0xff]
    %v488 = vld [vmem:[#allocation2 + $0x72] sm:$0xff]
    %s489 = scalar_lea.vmem [#allocation8], 256
    %v490 = vld [vmem:[%s489] sm:$0xff]
    %v491 = vld [vmem:[%s489 + $0x8] sm:$0xff]
    %v492 = vld [vmem:[%s489 + $0x10] sm:$0xff]
    %v493 = vld [vmem:[%s489 + $0x18] sm:$0xff]
    %v494 = vld [vmem:[%s489 + $0x20] sm:$0xff]
    %v495 = vld [vmem:[%s489 + $0x28] sm:$0xff]
    %v496 = vld [vmem:[%s489 + $0x30] sm:$0xff]
    %v497 = vld [vmem:[%s489 + $0x38] sm:$0xff]
    %v498 = vld [vmem:[%s489 + $0x40] sm:$0xff]
    %v499 = vld [vmem:[%s489 + $0x48] sm:$0xff]
    %v500 = vld [vmem:[%s489 + $0x50] sm:$0xff]
    %v501 = vld [vmem:[%s489 + $0x58] sm:$0xff]
    %v502 = vld [vmem:[%s489 + $0x60] sm:$0xff]
    %v503 = vld [vmem:[%s489 + $0x68] sm:$0xff]
    %v504 = vld [vmem:[%s489 + $0x70] sm:$0xff]
    %v505 = vld [vmem:[%s489 + $0x78] sm:$0xff]
    %506 = vmatprep.subr.mxu0 0.0
    %507 = vmatpush1.msra.mxu0 %v490
    %508 = vmatprep.subr.mxu0 0.0
    %509 = vmatpush1.msra.mxu0 %v491
    %510 = vmatprep.subr.mxu0 0.0
    %511 = vmatpush1.msra.mxu0 %v492
    %512 = vmatprep.subr.mxu0 0.0
    %513 = vmatpush1.msra.mxu0 %v493
    %514 = vmatprep.subr.mxu0 0.0
    %515 = vmatpush1.msra.mxu0 %v494
    %516 = vmatprep.subr.mxu0 0.0
    %517 = vmatpush1.msra.mxu0 %v495
    %518 = vmatprep.subr.mxu0 0.0
    %519 = vmatpush1.msra.mxu0 %v496
    %520 = vmatprep.subr.mxu0 0.0
    %521 = vmatpush1.msra.mxu0 %v497
    %522 = vmatprep.subr.mxu0 0.0
    %523 = vmatpush1.msra.mxu0 %v498
    %524 = vmatprep.subr.mxu0 0.0
    %525 = vmatpush1.msra.mxu0 %v499
    %526 = vmatprep.subr.mxu0 0.0
    %527 = vmatpush1.msra.mxu0 %v500
    %528 = vmatprep.subr.mxu0 0.0
    %529 = vmatpush1.msra.mxu0 %v501
    %530 = vmatprep.subr.mxu0 0.0
    %531 = vmatpush1.msra.mxu0 %v502
    %532 = vmatprep.subr.mxu0 0.0
    %533 = vmatpush1.msra.mxu0 %v503
    %534 = vmatprep.subr.mxu0 0.0
    %535 = vmatpush1.msra.mxu0 %v504
    %536 = vmatprep.subr.mxu0 0.0
    %537 = vmatpush1.msra.mxu0 %v505
    %538 = vmatprep.subr.mxu0 0.0
    %539 = vmatpush1.msra.mxu0 0.0
    %540 = vmatprep.subr.mxu0 0.0
    %541 = vmatpush1.msra.mxu0 0.0
    %542 = vmatprep.subr.mxu0 0.0
    %543 = vmatpush1.msra.mxu0 0.0
    %544 = vmatprep.subr.mxu0 0.0
    %545 = vmatpush1.msra.mxu0 0.0
    %546 = vmatprep.subr.mxu0 0.0
    %547 = vmatpush1.msra.mxu0 0.0
    %548 = vmatprep.subr.mxu0 0.0
    %549 = vmatpush1.msra.mxu0 0.0
    %550 = vmatprep.subr.mxu0 0.0
    %551 = vmatpush1.msra.mxu0 0.0
    %552 = vmatprep.subr.mxu0 0.0
    %553 = vmatpush1.msra.mxu0 0.0
    %554 = vmatprep.subr.mxu0 0.0
    %555 = vmatpush1.msra.mxu0 0.0
    %556 = vmatprep.subr.mxu0 0.0
    %557 = vmatpush1.msra.mxu0 0.0
    %558 = vmatprep.subr.mxu0 0.0
    %559 = vmatpush1.msra.mxu0 0.0
    %560 = vmatprep.subr.mxu0 0.0
    %561 = vmatpush1.msra.mxu0 0.0
    %562 = vmatprep.subr.mxu0 0.0
    %563 = vmatpush1.msra.mxu0 0.0
    %564 = vmatprep.subr.mxu0 0.0
    %565 = vmatpush1.msra.mxu0 0.0
    %566 = vmatprep.subr.mxu0 0.0
    %567 = vmatpush1.msra.mxu0 0.0
    %568 = vmatprep.subr.mxu0 0.0
    %569 = vmatpush1.msra.mxu0 0.0
    %570 = vmatprep.mubr.f32.mxu0 0.0
    %571 = vmatmul.mubr.f32.gmra.mrb[0].mxu0 %v481
    %v572 = vpop.f32.mrb[0].mxu0
    %v573 = vadd.f32 0.0, %v572
    %v574 = vpop.f32.mrb[0].mxu0
    %575 = vmatprep.mubr.f32.mxu0 0.0
    %576 = vmatmul.mubr.f32.gmra.mrb[0].mxu0 %v482
    %v577 = vpop.f32.mrb[0].mxu0
    %v578 = vadd.f32 0.0, %v577
    %v579 = vpop.f32.mrb[0].mxu0
    %580 = vmatprep.mubr.f32.mxu0 0.0
    %581 = vmatmul.mubr.f32.gmra.mrb[0].mxu0 %v483
    %v582 = vpop.f32.mrb[0].mxu0
    %v583 = vadd.f32 0.0, %v582
    %v584 = vpop.f32.mrb[0].mxu0
    %585 = vmatprep.mubr.f32.mxu0 0.0
    %586 = vmatmul.mubr.f32.gmra.mrb[0].mxu0 %v484
    %v587 = vpop.f32.mrb[0].mxu0
    %v588 = vadd.f32 0.0, %v587
    %v589 = vpop.f32.mrb[0].mxu0
    %590 = vmatprep.mubr.f32.mxu0 0.0
    %591 = vmatmul.mubr.f32.gmra.mrb[0].mxu0 %v485
    %v592 = vpop.f32.mrb[0].mxu0
    %v593 = vadd.f32 0.0, %v592
    %v594 = vpop.f32.mrb[0].mxu0
    %595 = vmatprep.mubr.f32.mxu0 0.0
    %596 = vmatmul.mubr.f32.gmra.mrb[0].mxu0 %v486
    %v597 = vpop.f32.mrb[0].mxu0
    %v598 = vadd.f32 0.0, %v597
    %v599 = vpop.f32.mrb[0].mxu0
    %600 = vmatprep.mubr.f32.mxu0 0.0
    %601 = vmatmul.mubr.f32.gmra.mrb[0].mxu0 %v487
    %v602 = vpop.f32.mrb[0].mxu0
    %v603 = vadd.f32 0.0, %v602
    %v604 = vpop.f32.mrb[0].mxu0
    %605 = vmatprep.mubr.f32.mxu0 0.0
    %606 = vmatmul.mubr.f32.gmra.mrb[0].mxu0 %v488
    %v607 = vpop.f32.mrb[0].mxu0
    %v608 = vadd.f32 0.0, %v607
    %v609 = vpop.f32.mrb[0].mxu0
    %610 = vdwg.mxu0
    %v611 = vadd.f32 %v443, %v573
    %v612 = vadd.f32 %v448, %v578
    %v613 = vadd.f32 %v453, %v583
    %v614 = vadd.f32 %v458, %v588
    %v615 = vadd.f32 %v463, %v593
    %v616 = vadd.f32 %v468, %v598
    %v617 = vadd.f32 %v473, %v603
    %v618 = vadd.f32 %v478, %v608
    %v619 = vld [vmem:[%s4] sm:$0x1]
    %v621 = vlaneseq
    %v622 = vshrl.u32 %v621, 7
    %v623 = vsub.s32 0, %v622
    %v624 = vrot.slane %v619, %v623
    %v626 = vadd.f32 %v611, %v624
    %v627 = vadd.f32 %v612, %v624
    %v628 = vadd.f32 %v613, %v624
    %v629 = vadd.f32 %v614, %v624
    %v630 = vadd.f32 %v615, %v624
    %v631 = vadd.f32 %v616, %v624
    %v632 = vadd.f32 %v617, %v624
    %v633 = vadd.f32 %v618, %v624
    %v634 = vmax.f32 %v626, 0.0
    %v635 = vmax.f32 %v627, 0.0
    %v636 = vmax.f32 %v628, 0.0
    %v637 = vmax.f32 %v629, 0.0
    %v638 = vmax.f32 %v630, 0.0
    %v639 = vmax.f32 %v631, 0.0
    %v640 = vmax.f32 %v632, 0.0
    %v641 = vmax.f32 %v633, 0.0
    %v642 = vrot.slane %v634, 4
    %v643 = vmax.f32 %v634, %v642
    %v644 = vrot.slane %v643, 2
    %v645 = vmax.f32 %v643, %v644
    %v646 = vrot.slane %v645, 1
    %v647 = vmax.f32 %v645, %v646
    %v648 = vrot.slane %v635, 4
    %v649 = vmax.f32 %v635, %v648
    %v650 = vrot.slane %v649, 2
    %v651 = vmax.f32 %v649, %v650
    %v652 = vrot.slane %v651, 1
    %v653 = vmax.f32 %v651, %v652
    %v654 = vrot.slane %v636, 4
    %v655 = vmax.f32 %v636, %v654
    %v656 = vrot.slane %v655, 2
    %v657 = vmax.f32 %v655, %v656
    %v658 = vrot.slane %v657, 1
    %v659 = vmax.f32 %v657, %v658
    %v660 = vrot.slane %v637, 4
    %v661 = vmax.f32 %v637, %v660
    %v662 = vrot.slane %v661, 2
    %v663 = vmax.f32 %v661, %v662
    %v664 = vrot.slane %v663, 1
    %v665 = vmax.f32 %v663, %v664
    %v666 = vrot.slane %v638, 4
    %v667 = vmax.f32 %v638, %v666
    %v668 = vrot.slane %v667, 2
    %v669 = vmax.f32 %v667, %v668
    %v670 = vrot.slane %v669, 1
    %v671 = vmax.f32 %v669, %v670
    %v672 = vrot.slane %v639, 4
    %v673 = vmax.f32 %v639, %v672
    %v674 = vrot.slane %v673, 2
    %v675 = vmax.f32 %v673, %v674
    %v676 = vrot.slane %v675, 1
    %v677 = vmax.f32 %v675, %v676
    %v678 = vrot.slane %v640, 4
    %v679 = vmax.f32 %v640, %v678
    %v680 = vrot.slane %v679, 2
    %v681 = vmax.f32 %v679, %v680
    %v682 = vrot.slane %v681, 1
    %v683 = vmax.f32 %v681, %v682
    %v684 = vrot.slane %v641, 4
    %v685 = vmax.f32 %v641, %v684
    %v686 = vrot.slane %v685, 2
    %v687 = vmax.f32 %v685, %v686
    %v688 = vrot.slane %v687, 1
    %v689 = vmax.f32 %v687, %v688
    %vm698 = vcmask 1041409
    %v699 = vsel %vm698, %v653, %v647
    %vm700 = vcmask 1042434
    %v701 = vsel %vm700, %v659, %v699
    %vm702 = vcmask 1043459
    %v703 = vsel %vm702, %v665, %v701
    %vm704 = vcmask 1044484
    %v705 = vsel %vm704, %v671, %v703
    %vm706 = vcmask 1045509
    %v707 = vsel %vm706, %v677, %v705
    %vm708 = vcmask 1046534
    %v709 = vsel %vm708, %v683, %v707
    %vm710 = vcmask 1047559
    %v711 = vsel %vm710, %v689, %v709
    %713 = vst [vmem:[#allocation9] sm:$0xff] %v711
    // Predicated region
    $region34: #{tpu_custom_call.1} parent=1 // pred_check
      _
    $region35: #{tpu_custom_call.1} parent=1 // pred_check_branch
      %715 = sbr.rel (0) target = $region37
    $region36: #{tpu_custom_call.1} parent=1 // pred_region
      %s717 = ssub.s32 128, 128
      %718 = vsyncadd [#allocation5], %s717
      %s720 = sshll.u32 [#allocation9], 4
      %s721 = int_to_ptr.vmem [resolvable:$true] %s720
      %723 = dma.vmem_to_hbm [thread:$0]  %s721, 128, %s5, [#allocation5]
    $region37: #{tpu_custom_call.1} parent=1 // pred_fallthru
      _
    // Predicated region
    $region38: #{tpu_custom_call.1} parent=1 // pred_check
      _
    $region39: #{tpu_custom_call.1} parent=1 // pred_check_branch
      %725 = sbr.rel (0) target = $region41
    $region40: #{tpu_custom_call.1} parent=1 // pred_region
      %726 = dma.done [#allocation5], 128
    $region41: #{tpu_custom_call.1} parent=1 // pred_fallthru
      _
    %727 = vsyncpa [#allocation4], 1
    %728 = vsyncpa [#allocation7], 1
    %729 = vsyncpa [#allocation5], 1

</llo_original>
